<compile_context>
chip_gen: v6e
topology: v6e:2x2x1
jax: 0.10.0
libtpu: 0.0.40
codegen_flags: <defaults>
</compile_context>

<pallas_src>
import functools

import jax
import jax.numpy as jnp
from jax.experimental import pallas as pl
from jax.experimental.pallas import tpu as pltpu


_TEMP_F32 = 8   # assumed number of block-sized f32 temporaries live in the body
_ACC_BUFS = 5   # number of (Ht, W) f32 accumulators


def _sum2d_to_11(x):
    # Full reduction of a 2D array, kept at rank 2 (avoid rank-0 values).
    return jnp.sum(jnp.sum(x, axis=1, keepdims=True), axis=0, keepdims=True)


def _inpainting_loss_kernel(mask_ref, out_ref, gt_ref, res_ref,
                            acc_hole, acc_valid, acc_absd, acc_tvh, acc_tvv,
                            acc_seam, prev_row, *, binary_mask):
    n = pl.program_id(1)
    h = pl.program_id(2)
    n_last = pl.num_programs(1) - 1
    h_last = pl.num_programs(2) - 1

    @pl.when((n == 0) & (h == 0))
    def _():
        acc_hole[...] = jnp.zeros_like(acc_hole)
        acc_valid[...] = jnp.zeros_like(acc_valid)
        acc_absd[...] = jnp.zeros_like(acc_absd)
        acc_tvh[...] = jnp.zeros_like(acc_tvh)
        acc_tvv[...] = jnp.zeros_like(acc_tvv)
        acc_seam[...] = jnp.zeros_like(acc_seam)

    # Inputs may be bf16 / narrow; compute path stays f32 (v5e has no bf16 VPU).
    m = mask_ref[...].astype(jnp.float32)   # (nb, Ht, W)
    o = out_ref[...].astype(jnp.float32)
    g = gt_ref[...].astype(jnp.float32)

    d = o - g
    one_minus_m = 1.0 - m
    omd = one_minus_m * d
    comp = g + omd                     # == mask*gt + (1-mask)*out

    if binary_mask:
        # m in {0,1}:  |(1-m)d| = (1-m)|d|,  |m d| = |d| - (1-m)|d|;
        # sum|d| is reconstructed as hole+valid in the wrapper (acc_absd unused).
        absd = jnp.abs(d)
        hole_v = one_minus_m * absd
        valid_v = absd - hole_v
    else:
        hole_v = jnp.abs(omd)          # == |comp - gt| (prc dedup, exact for any m)
        valid_v = jnp.abs(m * d)
        acc_absd[...] += jnp.sum(jnp.abs(d), axis=0)

    acc_hole[...] += jnp.sum(hole_v, axis=0)
    acc_valid[...] += jnp.sum(valid_v, axis=0)

    Ht = comp.shape[1]
    W = comp.shape[2]

    # Horizontal TV: lane rotate; mask the wrapped lane 0 with a (1,1,W) mask.
    lane = jax.lax.broadcasted_iota(jnp.int32, (1, 1, W), 2)
    hmask = (lane >= 1).astype(jnp.float32)
    dh = pltpu.roll(comp, shift=1, axis=2) - comp       # lane j: comp[j-1]-comp[j]
    acc_tvh[...] += jnp.sum(jnp.abs(dh) * hmask, axis=0)

    # Vertical TV within the H tile: sublane rotate; mask the wrapped row 0.
    row = jax.lax.broadcasted_iota(jnp.int32, (1, Ht, 1), 1)
    vmask = (row >= 1).astype(jnp.float32)
    dv = pltpu.roll(comp, shift=1, axis=1) - comp       # row r: comp[r-1]-comp[r]
    acc_tvv[...] += jnp.sum(jnp.abs(dv) * vmask, axis=0)

    # Vertical TV across the H-tile seam: previous tile's last row vs this row 0.
    @pl.when(h > 0)
    def _():
        seam = jnp.abs(comp[:, 0, :] - prev_row[...])            # (nb, W)
        acc_seam[...] += jnp.sum(seam, axis=0, keepdims=True)    # (1, W)

    prev_row[...] = comp[:, Ht - 1, :]

    @pl.when((n == n_last) & (h == h_last))
    def _():
        # One-shot XLU reductions; pack 5 scalars into a lane-dense slab.
        lane_o = jax.lax.broadcasted_iota(jnp.int32, (1, 8, 128), 2)
        tvv_total = _sum2d_to_11(acc_tvv[...]) + _sum2d_to_11(acc_seam[...])
        res = (jnp.where(lane_o == 0, _sum2d_to_11(acc_hole[...]), 0.0)
               + jnp.where(lane_o == 1, _sum2d_to_11(acc_valid[...]), 0.0)
               + jnp.where(lane_o == 2, _sum2d_to_11(acc_absd[...]), 0.0)
               + jnp.where(lane_o == 3, _sum2d_to_11(acc_tvh[...]), 0.0)
               + jnp.where(lane_o == 4, tvv_total, 0.0))
        res_ref[...] = res


def _vmem_capacity_bytes():
    try:
        info = pltpu.get_tpu_info()
        for name in ("vmem_capacity_bytes", "vmem_bytes", "vmem_size_bytes"):
            cap = getattr(info, name, None)
            if cap:
                return int(cap)
    except Exception:
        pass
    return 64 << 20   # conservative (v7x-sized) fallback when unknown


def _pick_ht(H, W, per_row, acc_per_row, misc, budget):
    """Largest H tile (divisor of H; multiple of 8 unless == H) fitting at n_block=1."""
    def fits(ht):
        return ht * per_row + W * 4 + ht * acc_per_row + misc <= budget
    if fits(H):
        return H
    d = (H // 8) * 8
    while d >= 8:
        if H % d == 0 and fits(d):
            return d
        d -= 8
    return H   # no valid tiling found; fall back to whole H and rely on headroom


def _pick_n_block(N, ht, W, per_row, acc_per_row, misc, budget, num_cores):
    per_image = ht * per_row + W * 4          # dbl-buffered streams + temps + prev_row slot
    avail = budget - ht * acc_per_row - misc
    nb = avail // per_image if avail > 0 else 1
    return max(1, min(int(nb), -(-N // num_cores)))


def inpainting_loss(mask, output, gt, *, binary_mask=False, num_cores=2,
                    n_block=None, ht=None, vmem_budget_bytes=None):
    """Pallas forward of InpaintingLoss (extractor=None).  `binary_mask=True`
    enables the VPU-op dedup and is only valid for masks with values in {0,1}."""
    B, C, H, W = output.shape
    N = B * C

    # Collapse (batch, channel): the per-channel loop never changes the L1
    # 'mean' divisor, only which elements are summed.  Keep caller dtypes
    # (bf16 / narrow masks stream fewer HBM bytes; the kernel upcasts to f32).
    m3 = mask.reshape(N, H, W)
    o3 = output.reshape(N, H, W)
    g3 = gt.reshape(N, H, W)

    in_itemsize = (jnp.dtype(m3.dtype).itemsize + jnp.dtype(o3.dtype).itemsize
                   + jnp.dtype(g3.dtype).itemsize)

    cap = _vmem_capacity_bytes()
    budget = vmem_budget_bytes if vmem_budget_bytes is not None else cap // 2
    vmem_limit = int(min(cap, budget + budget // 2))

    per_row = W * (2 * in_itemsize + 4 * _TEMP_F32)   # dbl-buffered inputs + f32 temporaries
    acc_per_row = _ACC_BUFS * W * 4                   # accumulators scale with Ht
    misc = 2 * W * 4 + (64 << 10)                     # seam acc + output + slack

    if ht is None:
        ht = _pick_ht(H, W, per_row, acc_per_row, misc, budget)
    assert H % ht == 0, (H, ht)
    if n_block is None:
        n_block = _pick_n_block(N, ht, W, per_row, acc_per_row, misc, budget, num_cores)

    nH = H // ht
    nN = -(-N // (num_cores * n_block))
    N_pad = num_cores * n_block * nN
    if N_pad != N:
        # Zero-padded images contribute exactly 0 to every |.| accumulator;
        # the divisors below keep using the original B, H, W.
        padw = ((0, N_pad - N), (0, 0), (0, 0))
        m3 = jnp.pad(m3, padw)
        o3 = jnp.pad(o3, padw)
        g3 = jnp.pad(g3, padw)

    grid = (num_cores, nN, nH)
    in_spec = pl.BlockSpec((n_block, ht, W), lambda p, n, h: (p * nN + n, h, 0))
    out_spec = pl.BlockSpec((1, 8, 128), lambda p, n, h: (p, 0, 0))

    cost = pl.CostEstimate(
        flops=int(20 * N_pad * H * W),
        transcendentals=0,
        bytes_accessed=int(N_pad * H * W * in_itemsize + num_cores * 8 * 128 * 4),
    )

    kernel = functools.partial(_inpainting_loss_kernel, binary_mask=binary_mask)

    res = pl.pallas_call(
        kernel,
        out_shape=jax.ShapeDtypeStruct((num_cores, 8, 128), jnp.float32),
        grid_spec=pltpu.PrefetchScalarGridSpec(
            num_scalar_prefetch=0,
            grid=grid,
            in_specs=[in_spec, in_spec, in_spec],
            out_specs=out_spec,
            scratch_shapes=[
                pltpu.VMEM((ht, W), jnp.float32),        # hole numerator
                pltpu.VMEM((ht, W), jnp.float32),        # valid numerator
                pltpu.VMEM((ht, W), jnp.float32),        # sum |out - gt| (general path)
                pltpu.VMEM((ht, W), jnp.float32),        # horizontal TV
                pltpu.VMEM((ht, W), jnp.float32),        # vertical TV (within H tile)
                pltpu.VMEM((1, W), jnp.float32),         # vertical TV across H-tile seams
                pltpu.VMEM((n_block, W), jnp.float32),   # carried last row for the seam
            ],
        ),
        compiler_params=pltpu.CompilerParams(
            dimension_semantics=("parallel", "arbitrary", "arbitrary"),
            vmem_limit_bytes=vmem_limit,
        ),
        cost_estimate=cost,
    )(m3, o3, g3)

    tot = jnp.sum(res[:, 0, :], axis=0)      # sum the per-core partial rows
    hole_s = tot[0]
    valid_s = tot[1]
    absd_s = hole_s + valid_s if binary_mask else tot[2]
    tvh_s = tot[3]
    tvv_s = tot[4]

    # L1Loss(mean): identical divisor per channel, so sum of per-channel means
    # == total_sum / per-channel element count (original B, H, W).
    n = float(B * H * W)
    n_tv_h = float(B * H * (W - 1))
    n_tv_v = float(B * (H - 1) * W)

    return {
        "hole": hole_s / n,
        "valid": valid_s / n,
        "prc": (absd_s + hole_s) / n,     # |comp - gt| == |(1-m)(out-gt)| == hole numerator
        "style": jnp.float32(0.0),        # extractor is None -> never accumulated
        "tv": tvh_s / n_tv_h + tvv_s / n_tv_v,
    }


def _reference_loss(mask, output, gt):
    """Pure-JAX reimplementation of the PyTorch forward (extractor=None)."""
    mask = mask.astype(jnp.float32)
    output = output.astype(jnp.float32)
    gt = gt.astype(jnp.float32)
    loss = {"hole": 0.0, "valid": 0.0, "prc": 0.0, "style": 0.0, "tv": 0.0}
    comp = mask * gt + (1.0 - mask) * output
    C = output.shape[1]
    for c in range(C):
        m = mask[:, c:c + 1]
        o = output[:, c:c + 1]
        g = gt[:, c:c + 1]
        oc = comp[:, c:c + 1]
        loss["hole"] += jnp.mean(jnp.abs((1.0 - m) * o - (1.0 - m) * g))
        loss["valid"] += jnp.mean(jnp.abs(m * o - m * g))
        loss["prc"] += jnp.mean(jnp.abs(o - g)) + jnp.mean(jnp.abs(oc - g))
        loss["tv"] += (jnp.mean(jnp.abs(oc[:, :, :, :-1] - oc[:, :, :, 1:]))
                       + jnp.mean(jnp.abs(oc[:, :, :-1, :] - oc[:, :, 1:, :])))
    return loss


def _check(got, ref, tag, tol=2e-4):
    for k in ("hole", "valid", "prc", "style", "tv"):
        a, b = float(got[k]), float(ref[k])
        assert abs(a - b) <= tol * max(1.0, abs(b)), (tag, k, a, b)


if __name__ == "__main__":
    key = jax.random.PRNGKey(0)
    k1, k2, k3, k4 = jax.random.split(key, 4)

    # Case 1: binary f32 mask, general path, explicit small tiling that
    # exercises the parallel axis, N accumulation and the vertical-TV seam
    # (grid = (2 cores, 2 N-blocks, 2 H-tiles)).
    B, C, H, W = 2, 4, 16, 16
    mask_b = (jax.random.uniform(k1, (B, C, H, W)) > 0.5).astype(jnp.float32)
    out = jax.random.normal(k2, (B, C, H, W), dtype=jnp.float32)
    gt = jax.random.normal(k3, (B, C, H, W), dtype=jnp.float32)
    ref = _reference_loss(mask_b, out, gt)

    got = inpainting_loss(mask_b, out, gt, binary_mask=False,
                          num_cores=2, n_block=2, ht=8)
    jax.block_until_ready(got)
    _check(got, ref, "general/tiled")

    # Case 2: same data through the binary-mask VPU-dedup path.
    got = inpainting_loss(mask_b, out, gt, binary_mask=True,
                          num_cores=2, n_block=2, ht=8)
    jax.block_until_ready(got)
    _check(got, ref, "binary/tiled")

    # Case 3: non-binary (soft) mask, auto tiling -> general path must be exact.
    mask_s = jax.random.uniform(k4, (B, C, H, W), dtype=jnp.float32)
    ref_s = _reference_loss(mask_s, out, gt)
    got = inpainting_loss(mask_s, out, gt, binary_mask=False)
    jax.block_until_ready(got)
    _check(got, ref_s, "soft-mask/auto")

    # Case 4: bf16 inputs (HBM narrowing path) with W > 128 and not a multiple
    # of 128 (exercises lane padding + roll-based TV), auto tiling.
    B2, C2, H2, W2 = 1, 2, 8, 144
    kk = jax.random.split(jax.random.PRNGKey(1), 3)
    mask2 = (jax.random.uniform(kk[0], (B2, C2, H2, W2)) > 0.5).astype(jnp.bfloat16)
    out2 = jax.random.normal(kk[1], (B2, C2, H2, W2), jnp.float32).astype(jnp.bfloat16)
    gt2 = jax.random.normal(kk[2], (B2, C2, H2, W2), jnp.float32).astype(jnp.bfloat16)
    ref2 = _reference_loss(mask2, out2, gt2)   # same bf16 values, f32 math
    got = inpainting_loss(mask2, out2, gt2, binary_mask=True)
    jax.block_until_ready(got)
    _check(got, ref2, "bf16/wide-W")

    print("KERNEL_OK")
</pallas_src>

<mosaic_0001>
module attributes {stable_mosaic.version = 11 : i64} {
  func.func @_inpainting_loss_kernel(%arg0: i32, %arg1: i32, %arg2: i32, %arg3: memref<2x8x16xf32, #tpu.memory_space<vmem>>, %arg4: memref<2x8x16xf32, #tpu.memory_space<vmem>>, %arg5: memref<2x8x16xf32, #tpu.memory_space<vmem>>, %arg6: memref<1x8x128xf32, #tpu.memory_space<vmem>>, %arg7: memref<8x16xf32, #tpu.memory_space<vmem>>, %arg8: memref<8x16xf32, #tpu.memory_space<vmem>>, %arg9: memref<8x16xf32, #tpu.memory_space<vmem>>, %arg10: memref<8x16xf32, #tpu.memory_space<vmem>>, %arg11: memref<8x16xf32, #tpu.memory_space<vmem>>, %arg12: memref<1x16xf32, #tpu.memory_space<vmem>>, %arg13: memref<2x16xf32, #tpu.memory_space<vmem>>) attributes {dimension_semantics = [#tpu.dimension_semantics<parallel>, #tpu.dimension_semantics<arbitrary>, #tpu.dimension_semantics<arbitrary>], iteration_bounds = array<i64: 2, 2, 2>, scalar_prefetch = 0 : i64, scratch_operands = 7 : i64, tpu.core_type = #tpu.core_type<tc>, window_params = [{transform_indices = @transform_0, window_bounds = array<i64: 2, 8, 16>}, {transform_indices = @transform_1, window_bounds = array<i64: 2, 8, 16>}, {transform_indices = @transform_2, window_bounds = array<i64: 2, 8, 16>}, {transform_indices = @transform_3, window_bounds = array<i64: 1, 8, 128>}]} {
    %c0_i32 = arith.constant 0 : i32
    %0 = arith.cmpi eq, %arg1, %c0_i32 : i32
    %c0_i32_0 = arith.constant 0 : i32
    %1 = arith.cmpi eq, %arg2, %c0_i32_0 : i32
    %2 = arith.andi %0, %1 : i1
    %3 = arith.extui %2 : i1 to i32
    %c0_i32_1 = arith.constant 0 : i32
    %4 = arith.cmpi ne, %3, %c0_i32_1 : i32
    scf.if %4 {
      %cst_45 = arith.constant 0.000000e+00 : f32
      %68 = vector.broadcast %cst_45 : f32 to vector<8x16xf32>
      %c0_46 = arith.constant 0 : index
      %c0_47 = arith.constant 0 : index
      %69 = vector.load %arg7[%c0_46, %c0_47] : memref<8x16xf32, #tpu.memory_space<vmem>>, vector<8x16xf32>
      tpu.vector_store %arg7[%c0_46, %c0_47], %68 {strides = array<i32>} : memref<8x16xf32, #tpu.memory_space<vmem>>, vector<8x16xf32>,
      %cst_48 = arith.constant 0.000000e+00 : f32
      %70 = vector.broadcast %cst_48 : f32 to vector<8x16xf32>
      %c0_49 = arith.constant 0 : index
      %c0_50 = arith.constant 0 : index
      %71 = vector.load %arg8[%c0_49, %c0_50] : memref<8x16xf32, #tpu.memory_space<vmem>>, vector<8x16xf32>
      tpu.vector_store %arg8[%c0_49, %c0_50], %70 {strides = array<i32>} : memref<8x16xf32, #tpu.memory_space<vmem>>, vector<8x16xf32>,
      %cst_51 = arith.constant 0.000000e+00 : f32
      %72 = vector.broadcast %cst_51 : f32 to vector<8x16xf32>
      %c0_52 = arith.constant 0 : index
      %c0_53 = arith.constant 0 : index
      %73 = vector.load %arg9[%c0_52, %c0_53] : memref<8x16xf32, #tpu.memory_space<vmem>>, vector<8x16xf32>
      tpu.vector_store %arg9[%c0_52, %c0_53], %72 {strides = array<i32>} : memref<8x16xf32, #tpu.memory_space<vmem>>, vector<8x16xf32>,
      %cst_54 = arith.constant 0.000000e+00 : f32
      %74 = vector.broadcast %cst_54 : f32 to vector<8x16xf32>
      %c0_55 = arith.constant 0 : index
      %c0_56 = arith.constant 0 : index
      %75 = vector.load %arg10[%c0_55, %c0_56] : memref<8x16xf32, #tpu.memory_space<vmem>>, vector<8x16xf32>
      tpu.vector_store %arg10[%c0_55, %c0_56], %74 {strides = array<i32>} : memref<8x16xf32, #tpu.memory_space<vmem>>, vector<8x16xf32>,
      %cst_57 = arith.constant 0.000000e+00 : f32
      %76 = vector.broadcast %cst_57 : f32 to vector<8x16xf32>
      %c0_58 = arith.constant 0 : index
      %c0_59 = arith.constant 0 : index
      %77 = vector.load %arg11[%c0_58, %c0_59] : memref<8x16xf32, #tpu.memory_space<vmem>>, vector<8x16xf32>
      tpu.vector_store %arg11[%c0_58, %c0_59], %76 {strides = array<i32>} : memref<8x16xf32, #tpu.memory_space<vmem>>, vector<8x16xf32>,
      %cst_60 = arith.constant 0.000000e+00 : f32
      %78 = vector.broadcast %cst_60 : f32 to vector<1x16xf32>
      %c0_61 = arith.constant 0 : index
      %c0_62 = arith.constant 0 : index
      %79 = vector.load %arg12[%c0_61, %c0_62] : memref<1x16xf32, #tpu.memory_space<vmem>>, vector<1x16xf32>
      tpu.vector_store %arg12[%c0_61, %c0_62], %78 {strides = array<i32>} : memref<1x16xf32, #tpu.memory_space<vmem>>, vector<1x16xf32>,
    } else {
    }
    %c0 = arith.constant 0 : index
    %c0_2 = arith.constant 0 : index
    %c0_3 = arith.constant 0 : index
    %5 = vector.load %arg3[%c0, %c0_2, %c0_3] : memref<2x8x16xf32, #tpu.memory_space<vmem>>, vector<2x8x16xf32>
    %c0_4 = arith.constant 0 : index
    %c0_5 = arith.constant 0 : index
    %c0_6 = arith.constant 0 : index
    %6 = vector.load %arg4[%c0_4, %c0_5, %c0_6] : memref<2x8x16xf32, #tpu.memory_space<vmem>>, vector<2x8x16xf32>
    %c0_7 = arith.constant 0 : index
    %c0_8 = arith.constant 0 : index
    %c0_9 = arith.constant 0 : index
    %7 = vector.load %arg5[%c0_7, %c0_8, %c0_9] : memref<2x8x16xf32, #tpu.memory_space<vmem>>, vector<2x8x16xf32>
    %8 = arith.subf %6, %7 : vector<2x8x16xf32>
    %cst = arith.constant 1.000000e+00 : f32
    %9 = vector.broadcast %cst : f32 to vector<2x8x16xf32>
    %10 = arith.subf %9, %5 : vector<2x8x16xf32>
    %11 = arith.mulf %10, %8 : vector<2x8x16xf32>
    %12 = arith.addf %7, %11 : vector<2x8x16xf32>
    %13 = math.absf %11 : vector<2x8x16xf32>
    %14 = arith.mulf %5, %8 : vector<2x8x16xf32>
    %15 = math.absf %14 : vector<2x8x16xf32>
    %c0_10 = arith.constant 0 : index
    %c0_11 = arith.constant 0 : index
    %16 = vector.load %arg9[%c0_10, %c0_11] : memref<8x16xf32, #tpu.memory_space<vmem>>, vector<8x16xf32>
    %17 = math.absf %8 : vector<2x8x16xf32>
    %cst_12 = arith.constant dense<0.000000e+00> : vector<8x16xf32>
    %18 = vector.multi_reduction <add>, %17, %cst_12 [0] : vector<2x8x16xf32> to vector<8x16xf32>
    %19 = arith.addf %16, %18 : vector<8x16xf32>
    %c0_13 = arith.constant 0 : index
    %c0_14 = arith.constant 0 : index
    %20 = vector.load %arg9[%c0_13, %c0_14] : memref<8x16xf32, #tpu.memory_space<vmem>>, vector<8x16xf32>
    tpu.vector_store %arg9[%c0_13, %c0_14], %19 {strides = array<i32>} : memref<8x16xf32, #tpu.memory_space<vmem>>, vector<8x16xf32>,
    %c0_15 = arith.constant 0 : index
    %c0_16 = arith.constant 0 : index
    %21 = vector.load %arg7[%c0_15, %c0_16] : memref<8x16xf32, #tpu.memory_space<vmem>>, vector<8x16xf32>
    %cst_17 = arith.constant dense<0.000000e+00> : vector<8x16xf32>
    %22 = vector.multi_reduction <add>, %13, %cst_17 [0] : vector<2x8x16xf32> to vector<8x16xf32>
    %23 = arith.addf %21, %22 : vector<8x16xf32>
    %c0_18 = arith.constant 0 : index
    %c0_19 = arith.constant 0 : index
    %24 = vector.load %arg7[%c0_18, %c0_19] : memref<8x16xf32, #tpu.memory_space<vmem>>, vector<8x16xf32>
    tpu.vector_store %arg7[%c0_18, %c0_19], %23 {strides = array<i32>} : memref<8x16xf32, #tpu.memory_space<vmem>>, vector<8x16xf32>,
    %c0_20 = arith.constant 0 : index
    %c0_21 = arith.constant 0 : index
    %25 = vector.load %arg8[%c0_20, %c0_21] : memref<8x16xf32, #tpu.memory_space<vmem>>, vector<8x16xf32>
    %cst_22 = arith.constant dense<0.000000e+00> : vector<8x16xf32>
    %26 = vector.multi_reduction <add>, %15, %cst_22 [0] : vector<2x8x16xf32> to vector<8x16xf32>
    %27 = arith.addf %25, %26 : vector<8x16xf32>
    %c0_23 = arith.constant 0 : index
    %c0_24 = arith.constant 0 : index
    %28 = vector.load %arg8[%c0_23, %c0_24] : memref<8x16xf32, #tpu.memory_space<vmem>>, vector<8x16xf32>
    tpu.vector_store %arg8[%c0_23, %c0_24], %27 {strides = array<i32>} : memref<8x16xf32, #tpu.memory_space<vmem>>, vector<8x16xf32>,
    %29 = tpu.iota {dimensions = array<i32: 2>} : vector<1x1x16xi32>
    %c1_i32 = arith.constant 1 : i32
    %30 = vector.broadcast %c1_i32 : i32 to vector<1x1x16xi32>
    %31 = arith.cmpi sge, %29, %30 : vector<1x1x16xi32>
    %32 = arith.extui %31 : vector<1x1x16xi1> to vector<1x1x16xi32>
    %33 = arith.sitofp %32 : vector<1x1x16xi32> to vector<1x1x16xf32>
    %c1_i32_25 = arith.constant 1 : i32
    %34 = tpu.dynamic_rotate %12 by %c1_i32_25 dim 2 : vector<2x8x16xf32>, i32 -> vector<2x8x16xf32>
    %35 = arith.subf %34, %12 : vector<2x8x16xf32>
    %c0_26 = arith.constant 0 : index
    %c0_27 = arith.constant 0 : index
    %36 = vector.load %arg10[%c0_26, %c0_27] : memref<8x16xf32, #tpu.memory_space<vmem>>, vector<8x16xf32>
    %37 = math.absf %35 : vector<2x8x16xf32>
    %38 = vector.broadcast %33 : vector<1x1x16xf32> to vector<2x8x16xf32>
    %39 = arith.mulf %37, %38 : vector<2x8x16xf32>
    %cst_28 = arith.constant dense<0.000000e+00> : vector<8x16xf32>
    %40 = vector.multi_reduction <add>, %39, %cst_28 [0] : vector<2x8x16xf32> to vector<8x16xf32>
    %41 = arith.addf %36, %40 : vector<8x16xf32>
    %c0_29 = arith.constant 0 : index
    %c0_30 = arith.constant 0 : index
    %42 = vector.load %arg10[%c0_29, %c0_30] : memref<8x16xf32, #tpu.memory_space<vmem>>, vector<8x16xf32>
    tpu.vector_store %arg10[%c0_29, %c0_30], %41 {strides = array<i32>} : memref<8x16xf32, #tpu.memory_space<vmem>>, vector<8x16xf32>,
    %43 = tpu.iota {dimensions = array<i32: 1>} : vector<1x8x1xi32>
    %c1_i32_31 = arith.constant 1 : i32
    %44 = vector.broadcast %c1_i32_31 : i32 to vector<1x8x1xi32>
    %45 = arith.cmpi sge, %43, %44 : vector<1x8x1xi32>
    %46 = arith.extui %45 : vector<1x8x1xi1> to vector<1x8x1xi32>
    %47 = arith.sitofp %46 : vector<1x8x1xi32> to vector<1x8x1xf32>
    %c1_i32_32 = arith.constant 1 : i32
    %48 = tpu.dynamic_rotate %12 by %c1_i32_32 dim 1 : vector<2x8x16xf32>, i32 -> vector<2x8x16xf32>
    %49 = arith.subf %48, %12 : vector<2x8x16xf32>
    %c0_33 = arith.constant 0 : index
    %c0_34 = arith.constant 0 : index
    %50 = vector.load %arg11[%c0_33, %c0_34] : memref<8x16xf32, #tpu.memory_space<vmem>>, vector<8x16xf32>
    %51 = math.absf %49 : vector<2x8x16xf32>
    %52 = vector.broadcast %47 : vector<1x8x1xf32> to vector<2x8x16xf32>
    %53 = arith.mulf %51, %52 : vector<2x8x16xf32>
    %cst_35 = arith.constant dense<0.000000e+00> : vector<8x16xf32>
    %54 = vector.multi_reduction <add>, %53, %cst_35 [0] : vector<2x8x16xf32> to vector<8x16xf32>
    %55 = arith.addf %50, %54 : vector<8x16xf32>
    %c0_36 = arith.constant 0 : index
    %c0_37 = arith.constant 0 : index
    %56 = vector.load %arg11[%c0_36, %c0_37] : memref<8x16xf32, #tpu.memory_space<vmem>>, vector<8x16xf32>
    tpu.vector_store %arg11[%c0_36, %c0_37], %55 {strides = array<i32>} : memref<8x16xf32, #tpu.memory_space<vmem>>, vector<8x16xf32>,
    %c0_i32_38 = arith.constant 0 : i32
    %57 = arith.cmpi sgt, %arg2, %c0_i32_38 : i32
    %58 = arith.extui %57 : i1 to i32
    %c0_i32_39 = arith.constant 0 : i32
    %59 = arith.cmpi ne, %58, %c0_i32_39 : i32
    scf.if %59 {
      %68 = vector.extract_strided_slice %12 {offsets = [0, 0, 0], sizes = [2, 1, 16], strides = [1, 1, 1]} : vector<2x8x16xf32> to vector<2x1x16xf32>
      %69 = vector.shape_cast %68 : vector<2x1x16xf32> to vector<2x16xf32>
      %c0_45 = arith.constant 0 : index
      %c0_46 = arith.constant 0 : index
      %70 = vector.load %arg13[%c0_45, %c0_46] : memref<2x16xf32, #tpu.memory_space<vmem>>, vector<2x16xf32>
      %71 = arith.subf %69, %70 : vector<2x16xf32>
      %72 = math.absf %71 : vector<2x16xf32>
      %c0_47 = arith.constant 0 : index
      %c0_48 = arith.constant 0 : index
      %73 = vector.load %arg12[%c0_47, %c0_48] : memref<1x16xf32, #tpu.memory_space<vmem>>, vector<1x16xf32>
      %cst_49 = arith.constant dense<0.000000e+00> : vector<16xf32>
      %74 = vector.multi_reduction <add>, %72, %cst_49 [0] : vector<2x16xf32> to vector<16xf32>
      %75 = vector.shape_cast %74 : vector<16xf32> to vector<1x16xf32>
      %76 = arith.addf %73, %75 : vector<1x16xf32>
      %c0_50 = arith.constant 0 : index
      %c0_51 = arith.constant 0 : index
      %77 = vector.load %arg12[%c0_50, %c0_51] : memref<1x16xf32, #tpu.memory_space<vmem>>, vector<1x16xf32>
      tpu.vector_store %arg12[%c0_50, %c0_51], %76 {strides = array<i32>} : memref<1x16xf32, #tpu.memory_space<vmem>>, vector<1x16xf32>,
    } else {
    }
    %60 = vector.extract_strided_slice %12 {offsets = [0, 7, 0], sizes = [2, 1, 16], strides = [1, 1, 1]} : vector<2x8x16xf32> to vector<2x1x16xf32>
    %61 = vector.shape_cast %60 : vector<2x1x16xf32> to vector<2x16xf32>
    %c0_40 = arith.constant 0 : index
    %c0_41 = arith.constant 0 : index
    %62 = vector.load %arg13[%c0_40, %c0_41] : memref<2x16xf32, #tpu.memory_space<vmem>>, vector<2x16xf32>
    tpu.vector_store %arg13[%c0_40, %c0_41], %61 {strides = array<i32>} : memref<2x16xf32, #tpu.memory_space<vmem>>, vector<2x16xf32>,
    %c1_i32_42 = arith.constant 1 : i32
    %63 = arith.cmpi eq, %arg1, %c1_i32_42 : i32
    %c1_i32_43 = arith.constant 1 : i32
    %64 = arith.cmpi eq, %arg2, %c1_i32_43 : i32
    %65 = arith.andi %63, %64 : i1
    %66 = arith.extui %65 : i1 to i32
    %c0_i32_44 = arith.constant 0 : i32
    %67 = arith.cmpi ne, %66, %c0_i32_44 : i32
    scf.if %67 {
      %68 = tpu.iota {dimensions = array<i32: 2>} : vector<1x8x128xi32>
      %c0_45 = arith.constant 0 : index
      %c0_46 = arith.constant 0 : index
      %69 = vector.load %arg11[%c0_45, %c0_46] : memref<8x16xf32, #tpu.memory_space<vmem>>, vector<8x16xf32>
      %cst_47 = arith.constant dense<0.000000e+00> : vector<8xf32>
      %70 = vector.multi_reduction <add>, %69, %cst_47 [1] : vector<8x16xf32> to vector<8xf32>
      %71 = vector.shape_cast %70 : vector<8xf32> to vector<8x1xf32>
      %cst_48 = arith.constant dense<0.000000e+00> : vector<1xf32>
      %72 = vector.multi_reduction <add>, %71, %cst_48 [0] : vector<8x1xf32> to vector<1xf32>
      %73 = vector.shape_cast %72 : vector<1xf32> to vector<1x1xf32>
      %c0_49 = arith.constant 0 : index
      %c0_50 = arith.constant 0 : index
      %74 = vector.load %arg12[%c0_49, %c0_50] : memref<1x16xf32, #tpu.memory_space<vmem>>, vector<1x16xf32>
      %cst_51 = arith.constant dense<0.000000e+00> : vector<1xf32>
      %75 = vector.multi_reduction <add>, %74, %cst_51 [1] : vector<1x16xf32> to vector<1xf32>
      %76 = vector.shape_cast %75 : vector<1xf32> to vector<1x1xf32>
      %cst_52 = arith.constant dense<0.000000e+00> : vector<1xf32>
      %77 = vector.multi_reduction <add>, %76, %cst_52 [0] : vector<1x1xf32> to vector<1xf32>
      %78 = vector.shape_cast %77 : vector<1xf32> to vector<1x1xf32>
      %79 = arith.addf %73, %78 : vector<1x1xf32>
      %c0_i32_53 = arith.constant 0 : i32
      %80 = vector.broadcast %c0_i32_53 : i32 to vector<1x8x128xi32>
      %81 = arith.cmpi eq, %68, %80 : vector<1x8x128xi32>
      %c0_54 = arith.constant 0 : index
      %c0_55 = arith.constant 0 : index
      %82 = vector.load %arg7[%c0_54, %c0_55] : memref<8x16xf32, #tpu.memory_space<vmem>>, vector<8x16xf32>
      %cst_56 = arith.constant dense<0.000000e+00> : vector<8xf32>
      %83 = vector.multi_reduction <add>, %82, %cst_56 [1] : vector<8x16xf32> to vector<8xf32>
      %84 = vector.shape_cast %83 : vector<8xf32> to vector<8x1xf32>
      %cst_57 = arith.constant dense<0.000000e+00> : vector<1xf32>
      %85 = vector.multi_reduction <add>, %84, %cst_57 [0] : vector<8x1xf32> to vector<1xf32>
      %86 = vector.shape_cast %85 : vector<1xf32> to vector<1x1xf32>
      %cst_58 = arith.constant 0.000000e+00 : f32
      %87 = vector.shape_cast %86 : vector<1x1xf32> to vector<1x1x1xf32>
      %88 = vector.broadcast %87 : vector<1x1x1xf32> to vector<1x8x128xf32>
      %89 = vector.broadcast %cst_58 : f32 to vector<1x8x128xf32>
      %90 = arith.select %81, %88, %89 : vector<1x8x128xi1>, vector<1x8x128xf32>
      %c1_i32_59 = arith.constant 1 : i32
      %91 = vector.broadcast %c1_i32_59 : i32 to vector<1x8x128xi32>
      %92 = arith.cmpi eq, %68, %91 : vector<1x8x128xi32>
      %c0_60 = arith.constant 0 : index
      %c0_61 = arith.constant 0 : index
      %93 = vector.load %arg8[%c0_60, %c0_61] : memref<8x16xf32, #tpu.memory_space<vmem>>, vector<8x16xf32>
      %cst_62 = arith.constant dense<0.000000e+00> : vector<8xf32>
      %94 = vector.multi_reduction <add>, %93, %cst_62 [1] : vector<8x16xf32> to vector<8xf32>
      %95 = vector.shape_cast %94 : vector<8xf32> to vector<8x1xf32>
      %cst_63 = arith.constant dense<0.000000e+00> : vector<1xf32>
      %96 = vector.multi_reduction <add>, %95, %cst_63 [0] : vector<8x1xf32> to vector<1xf32>
      %97 = vector.shape_cast %96 : vector<1xf32> to vector<1x1xf32>
      %cst_64 = arith.constant 0.000000e+00 : f32
      %98 = vector.shape_cast %97 : vector<1x1xf32> to vector<1x1x1xf32>
      %99 = vector.broadcast %98 : vector<1x1x1xf32> to vector<1x8x128xf32>
      %100 = vector.broadcast %cst_64 : f32 to vector<1x8x128xf32>
      %101 = arith.select %92, %99, %100 : vector<1x8x128xi1>, vector<1x8x128xf32>
      %102 = arith.addf %90, %101 : vector<1x8x128xf32>
      %c2_i32 = arith.constant 2 : i32
      %103 = vector.broadcast %c2_i32 : i32 to vector<1x8x128xi32>
      %104 = arith.cmpi eq, %68, %103 : vector<1x8x128xi32>
      %c0_65 = arith.constant 0 : index
      %c0_66 = arith.constant 0 : index
      %105 = vector.load %arg9[%c0_65, %c0_66] : memref<8x16xf32, #tpu.memory_space<vmem>>, vector<8x16xf32>
      %cst_67 = arith.constant dense<0.000000e+00> : vector<8xf32>
      %106 = vector.multi_reduction <add>, %105, %cst_67 [1] : vector<8x16xf32> to vector<8xf32>
      %107 = vector.shape_cast %106 : vector<8xf32> to vector<8x1xf32>
      %cst_68 = arith.constant dense<0.000000e+00> : vector<1xf32>
      %108 = vector.multi_reduction <add>, %107, %cst_68 [0] : vector<8x1xf32> to vector<1xf32>
      %109 = vector.shape_cast %108 : vector<1xf32> to vector<1x1xf32>
      %cst_69 = arith.constant 0.000000e+00 : f32
      %110 = vector.shape_cast %109 : vector<1x1xf32> to vector<1x1x1xf32>
      %111 = vector.broadcast %110 : vector<1x1x1xf32> to vector<1x8x128xf32>
      %112 = vector.broadcast %cst_69 : f32 to vector<1x8x128xf32>
      %113 = arith.select %104, %111, %112 : vector<1x8x128xi1>, vector<1x8x128xf32>
      %114 = arith.addf %102, %113 : vector<1x8x128xf32>
      %c3_i32 = arith.constant 3 : i32
      %115 = vector.broadcast %c3_i32 : i32 to vector<1x8x128xi32>
      %116 = arith.cmpi eq, %68, %115 : vector<1x8x128xi32>
      %c0_70 = arith.constant 0 : index
      %c0_71 = arith.constant 0 : index
      %117 = vector.load %arg10[%c0_70, %c0_71] : memref<8x16xf32, #tpu.memory_space<vmem>>, vector<8x16xf32>
      %cst_72 = arith.constant dense<0.000000e+00> : vector<8xf32>
      %118 = vector.multi_reduction <add>, %117, %cst_72 [1] : vector<8x16xf32> to vector<8xf32>
      %119 = vector.shape_cast %118 : vector<8xf32> to vector<8x1xf32>
      %cst_73 = arith.constant dense<0.000000e+00> : vector<1xf32>
      %120 = vector.multi_reduction <add>, %119, %cst_73 [0] : vector<8x1xf32> to vector<1xf32>
      %121 = vector.shape_cast %120 : vector<1xf32> to vector<1x1xf32>
      %cst_74 = arith.constant 0.000000e+00 : f32
      %122 = vector.shape_cast %121 : vector<1x1xf32> to vector<1x1x1xf32>
      %123 = vector.broadcast %122 : vector<1x1x1xf32> to vector<1x8x128xf32>
      %124 = vector.broadcast %cst_74 : f32 to vector<1x8x128xf32>
      %125 = arith.select %116, %123, %124 : vector<1x8x128xi1>, vector<1x8x128xf32>
      %126 = arith.addf %114, %125 : vector<1x8x128xf32>
      %c4_i32 = arith.constant 4 : i32
      %127 = vector.broadcast %c4_i32 : i32 to vector<1x8x128xi32>
      %128 = arith.cmpi eq, %68, %127 : vector<1x8x128xi32>
      %cst_75 = arith.constant 0.000000e+00 : f32
      %129 = vector.shape_cast %79 : vector<1x1xf32> to vector<1x1x1xf32>
      %130 = vector.broadcast %129 : vector<1x1x1xf32> to vector<1x8x128xf32>
      %131 = vector.broadcast %cst_75 : f32 to vector<1x8x128xf32>
      %132 = arith.select %128, %130, %131 : vector<1x8x128xi1>, vector<1x8x128xf32>
      %133 = arith.addf %126, %132 : vector<1x8x128xf32>
      %c0_76 = arith.constant 0 : index
      %c0_77 = arith.constant 0 : index
      %c0_78 = arith.constant 0 : index
      %134 = vector.load %arg6[%c0_76, %c0_77, %c0_78] : memref<1x8x128xf32, #tpu.memory_space<vmem>>, vector<1x8x128xf32>
      tpu.vector_store %arg6[%c0_76, %c0_77, %c0_78], %133 {strides = array<i32>} : memref<1x8x128xf32, #tpu.memory_space<vmem>>, vector<1x8x128xf32>,
    } else {
    }
    return
  }
  func.func @transform_0(%arg0: i32, %arg1: i32, %arg2: i32) -> (i32, i32, i32) {
    %c2_i32 = arith.constant 2 : i32
    %0 = arith.muli %arg0, %c2_i32 : i32
    %1 = arith.addi %0, %arg1 : i32
    %c0_i32 = arith.constant 0 : i32
    %c0_i32_0 = arith.constant 0 : i32
    return %1, %arg2, %c0_i32 : i32, i32, i32
  }
  func.func @transform_1(%arg0: i32, %arg1: i32, %arg2: i32) -> (i32, i32, i32) {
    %c2_i32 = arith.constant 2 : i32
    %0 = arith.muli %arg0, %c2_i32 : i32
    %1 = arith.addi %0, %arg1 : i32
    %c0_i32 = arith.constant 0 : i32
    %c0_i32_0 = arith.constant 0 : i32
    return %1, %arg2, %c0_i32 : i32, i32, i32
  }
  func.func @transform_2(%arg0: i32, %arg1: i32, %arg2: i32) -> (i32, i32, i32) {
    %c2_i32 = arith.constant 2 : i32
    %0 = arith.muli %arg0, %c2_i32 : i32
    %1 = arith.addi %0, %arg1 : i32
    %c0_i32 = arith.constant 0 : i32
    %c0_i32_0 = arith.constant 0 : i32
    return %1, %arg2, %c0_i32 : i32, i32, i32
  }
  func.func @transform_3(%arg0: i32, %arg1: i32, %arg2: i32) -> (i32, i32, i32) {
    %c0_i32 = arith.constant 0 : i32
    %c0_i32_0 = arith.constant 0 : i32
    %c0_i32_1 = arith.constant 0 : i32
    return %arg0, %c0_i32, %c0_i32_0 : i32, i32, i32
  }
}

</mosaic_0001>

<llo_original>
// kernel: tpu_custom_call.1
$region0: #{tpu_custom_call.1}
  #allocation0 [shape = 'u32[]', space=smem, size = 0x4, offset = 0x4, fixed_abs, tag = 'smem constant byte address 0x4 - core index']
  #allocation1 [shape = 'u32[144,128]{1,0:T(1,128)}', space=vmem, size = 0x12000, scoped, tag = 'internal scratch']
  #allocation2 [shape = 'f32[8,16]{1,0:T(8,128)}', space=vmem, size = 0x1000, scoped, tag = 'scratch operand']
  #allocation3 [shape = 'f32[8,16]{1,0:T(8,128)}', space=vmem, size = 0x1000, scoped, tag = 'scratch operand']
  #allocation4 [shape = 'f32[8,16]{1,0:T(8,128)}', space=vmem, size = 0x1000, scoped, tag = 'scratch operand']
  #allocation5 [shape = 'f32[8,16]{1,0:T(8,128)}', space=vmem, size = 0x1000, scoped, tag = 'scratch operand']
  #allocation6 [shape = 'f32[8,16]{1,0:T(8,128)}', space=vmem, size = 0x1000, scoped, tag = 'scratch operand']
  #allocation7 [shape = 'f32[1,16]{1,0:T(1,128)}', space=vmem, size = 0x200, scoped, tag = 'scratch operand']
  #allocation8 [shape = 'f32[2,16]{1,0:T(2,128)}', space=vmem, size = 0x400, scoped, tag = 'scratch operand']
  %s0 = inlined_call_operand.hbm [shape: f32[8,16,16], index: 0, kind: input, shape index: {}]
  %s1 = inlined_call_operand.hbm [shape: f32[8,16,16], index: 1, kind: input, shape index: {}]
  %s2 = inlined_call_operand.hbm [shape: f32[8,16,16], index: 2, kind: input, shape index: {}]
  %s3 = inlined_call_operand.hbm [shape: f32[2,8,128], index: 3, kind: output, shape index: {}]
  %s4 = sld [smem:[#allocation0]]
  $region69: #{tpu_custom_call.1} parent=0
    _
  %s6 = ssub.s32 1, %s4
  %s7 = scalar_select 0, %s6, %s4
  $region1: #{tpu_custom_call.1} parent=0
    #allocation9 [shape = 'u8[16384]{0}', space=vmem, size = 0x4000, scoped, tag = 'input window, operand 0']
    #allocation10 [shape = 's32[2]{0}', space=sflag, size = 0x8, scoped, tag = 'scoped memory for tpu_custom_call.1']
    #allocation11 [shape = 's32[2]{0}', space=sflag, size = 0x8, scoped, tag = 'scoped memory for tpu_custom_call.1']
    #allocation12 [shape = 'u8[16384]{0}', space=vmem, size = 0x4000, scoped, tag = 'input window, operand 1']
    #allocation13 [shape = 's32[2]{0}', space=sflag, size = 0x8, scoped, tag = 'scoped memory for tpu_custom_call.1']
    #allocation14 [shape = 'u8[16384]{0}', space=vmem, size = 0x4000, scoped, tag = 'input window, operand 2']
    #allocation15 [shape = 'u8[8192]{0}', space=vmem, size = 0x2000, scoped, tag = 'output window, operand 0']
    %8 = vsyncpa [#allocation10], 0
    %s9 = scalar_lea.sflag [#allocation10], 1
    %10 = vsyncpa %s9, 0
    %11 = vsyncpa [#allocation13], 0
    %s12 = scalar_lea.sflag [#allocation13], 1
    %13 = vsyncpa %s12, 0
    %14 = vsyncpa [#allocation11], 0
    %s15 = scalar_lea.sflag [#allocation11], 1
    %16 = vsyncpa %s15, 0
    loop: start=0, step=1, limit=10
    $region2: #{tpu_custom_call.1} parent=1 // loop_pre_header
      _
    $region3: #{tpu_custom_call.1} parent=1 // loop_header
      %s18 = sphi 0, %s22
      %p19 = scmp.ge.s32.totalorder %s18, 10
      %s25 = sphi 0, %s44
      %s26 = sphi 0, %s40
      %s27 = sphi 0, %s36
      %s28 = sphi 0, %s25
      %s29 = sphi 0, %s26
      %s30 = sphi 0, %s27
      %s31 = sphi 0, %s28
      %s32 = sphi 0, %s29
      %s33 = sphi 0, %s30
      %s53 = sphi 0, %s55
      %s56 = sphi 0, %s53
      %s57 = sphi 0, %s56
      %s73 = sphi 0, %s57
      %s85 = sphi 0, %s87
      %s88 = sphi 0, %s85
      %s89 = sphi 0, %s88
      %s105 = sphi 0, %s89
      %s117 = sphi 0, %s119
      %s120 = sphi 0, %s117
      %s121 = sphi 0, %s120
      %s137 = sphi 0, %s121
      %s143 = sphi 0, %s145
      %s146 = sphi 0, %s143
      %s147 = sphi 0, %s146
      %s163 = sphi 0, %s147
    $region4: #{tpu_custom_call.1} parent=1 // loop_header_branch
      %21 = sbr.rel (%p19) target = $region8
    $region5: #{tpu_custom_call.1} parent=1 // loop_body
      %s23 = ssub.s32 %s18, 1
      %s24 = ssub.s32 %s18, 2
      %s34 = sadd.s32 1, %s27
      %p35 = scmp.ge.s32.totalorder %s34, 2
      %s36 = scalar_select %p35, 0, %s34
      %s37 = sadd.s32 1, %s26
      %s38 = scalar_select %p35, %s37, %s26
      %p39 = scmp.ge.s32.totalorder %s38, 2
      %s40 = scalar_select %p39, 0, %s38
      %s41 = sadd.s32 1, %s25
      %s42 = scalar_select %p39, %s41, %s25
      %p43 = scmp.ge.s32.totalorder %s42, 2
      %s44 = scalar_select %p43, 0, %s42
      %s45 = smul.u32 %s25, 2
      %s46 = sadd.s32 %s45, %s26
      %s47 = smul.u32 %s44, 2
      %s48 = sadd.s32 %s47, %s40
      %s49 = ssub.s32 %s46, %s48
      %s50 = ssub.s32 %s27, %s36
      %s51 = sor.u32 %s49, %s50
      %p52 = scmp.eq.s32.totalorder %s51, 0
      %s54 = sadd.s32 %s53, 1
      %s55 = scalar_select %p52, %s53, %s54
      %p58 = pneg %p52
      %p59 = scmp.eq.s32.totalorder %s18, 7
      %p60 = por %p58, %p59
      %p61 = scmp.ne.s32.totalorder %s53, %s56
      %p62 = scmp.eq.s32.totalorder %s18, 0
      %p63 = por %p61, %p62
      %p64 = scmp.ne.s32.totalorder %s53, %s56
      %p65 = scmp.eq.s32.totalorder %s23, 7
      %p66 = por %p64, %p65
      %p67 = scmp.ne.s32.totalorder %s56, %s57
      %p68 = scmp.eq.s32.totalorder %s23, 0
      %p69 = por %p67, %p68
      %p70 = scmp.ne.s32.totalorder %s56, %s57
      %p71 = scmp.eq.s32.totalorder %s24, 7
      %p72 = por %p70, %p71
      %p74 = scmp.ne.s32.totalorder %s57, %s73
      %p75 = scmp.eq.s32.totalorder %s24, 0
      %p76 = por %p74, %p75
      %s77 = smul.u32 %s25, 2
      %s78 = sadd.s32 %s77, %s26
      %s79 = smul.u32 %s44, 2
      %s80 = sadd.s32 %s79, %s40
      %s81 = ssub.s32 %s78, %s80
      %s82 = ssub.s32 %s27, %s36
      %s83 = sor.u32 %s81, %s82
      %p84 = scmp.eq.s32.totalorder %s83, 0
      %s86 = sadd.s32 %s85, 1
      %s87 = scalar_select %p84, %s85, %s86
      %p90 = pneg %p84
      %p91 = scmp.eq.s32.totalorder %s18, 7
      %p92 = por %p90, %p91
      %p93 = scmp.ne.s32.totalorder %s85, %s88
      %p94 = scmp.eq.s32.totalorder %s18, 0
      %p95 = por %p93, %p94
      %p96 = scmp.ne.s32.totalorder %s85, %s88
      %p97 = scmp.eq.s32.totalorder %s23, 7
      %p98 = por %p96, %p97
      %p99 = scmp.ne.s32.totalorder %s88, %s89
      %p100 = scmp.eq.s32.totalorder %s23, 0
      %p101 = por %p99, %p100
      %p102 = scmp.ne.s32.totalorder %s88, %s89
      %p103 = scmp.eq.s32.totalorder %s24, 7
      %p104 = por %p102, %p103
      %p106 = scmp.ne.s32.totalorder %s89, %s105
      %p107 = scmp.eq.s32.totalorder %s24, 0
      %p108 = por %p106, %p107
      %s109 = smul.u32 %s25, 2
      %s110 = sadd.s32 %s109, %s26
      %s111 = smul.u32 %s44, 2
      %s112 = sadd.s32 %s111, %s40
      %s113 = ssub.s32 %s110, %s112
      %s114 = ssub.s32 %s27, %s36
      %s115 = sor.u32 %s113, %s114
      %p116 = scmp.eq.s32.totalorder %s115, 0
      %s118 = sadd.s32 %s117, 1
      %s119 = scalar_select %p116, %s117, %s118
      %p122 = pneg %p116
      %p123 = scmp.eq.s32.totalorder %s18, 7
      %p124 = por %p122, %p123
      %p125 = scmp.ne.s32.totalorder %s117, %s120
      %p126 = scmp.eq.s32.totalorder %s18, 0
      %p127 = por %p125, %p126
      %p128 = scmp.ne.s32.totalorder %s117, %s120
      %p129 = scmp.eq.s32.totalorder %s23, 7
      %p130 = por %p128, %p129
      %p131 = scmp.ne.s32.totalorder %s120, %s121
      %p132 = scmp.eq.s32.totalorder %s23, 0
      %p133 = por %p131, %p132
      %p134 = scmp.ne.s32.totalorder %s120, %s121
      %p135 = scmp.eq.s32.totalorder %s24, 7
      %p136 = por %p134, %p135
      %p138 = scmp.ne.s32.totalorder %s121, %s137
      %p139 = scmp.eq.s32.totalorder %s24, 0
      %p140 = por %p138, %p139
      %s141 = ssub.s32 %s25, %s44
      %p142 = scmp.eq.s32.totalorder %s141, 0
      %s144 = sadd.s32 %s143, 1
      %s145 = scalar_select %p142, %s143, %s144
      %p148 = pneg %p142
      %p149 = scmp.eq.s32.totalorder %s18, 7
      %p150 = por %p148, %p149
      %p151 = scmp.ne.s32.totalorder %s143, %s146
      %p152 = scmp.eq.s32.totalorder %s18, 0
      %p153 = por %p151, %p152
      %p154 = scmp.ne.s32.totalorder %s143, %s146
      %p155 = scmp.eq.s32.totalorder %s23, 7
      %p156 = por %p154, %p155
      %p157 = scmp.ne.s32.totalorder %s146, %s147
      %p158 = scmp.eq.s32.totalorder %s23, 0
      %p159 = por %p157, %p158
      %p160 = scmp.ne.s32.totalorder %s146, %s147
      %p161 = scmp.eq.s32.totalorder %s24, 7
      %p162 = por %p160, %p161
      %p164 = scmp.ne.s32.totalorder %s147, %s163
      %p165 = scmp.eq.s32.totalorder %s24, 0
      %p166 = por %p164, %p165
      %p167 = scmp.le.s32.totalorder 1, %s18
      %p168 = scmp.lt.s32.totalorder %s18, 9
      %p169 = pnand %p167, %p168
      %p170 = pneg %p169
      // Predicated region
      $region9: #{tpu_custom_call.1} parent=5 // pred_check
        _
      $region10: #{tpu_custom_call.1} parent=5 // pred_check_branch
        %172 = sbr.rel (%p169) target = $region12
      $region11: #{tpu_custom_call.1} parent=5 // pred_region
        %s173 = ssub.s32 %s18, 1
      $region12: #{tpu_custom_call.1} parent=5 // pred_fallthru
        _
      %p174 = scmp.lt.s32.totalorder %s18, 8
      // Predicated region
      $region13: #{tpu_custom_call.1} parent=5 // pred_check
        %p175 = pneg %p174
      $region14: #{tpu_custom_call.1} parent=5 // pred_check_branch
        %177 = sbr.rel (%p175) target = $region16
      $region15: #{tpu_custom_call.1} parent=5 // pred_region
        // Predicated region
        $region17: #{tpu_custom_call.1} parent=15 // pred_check
          %p178 = pneg %p63
        $region18: #{tpu_custom_call.1} parent=15 // pred_check_branch
          %180 = sbr.rel (%p178) target = $region20
        $region19: #{tpu_custom_call.1} parent=15 // pred_region
          %s181 = sand.u32 %s53, 1
          %s182 = scalar_lea.sflag [#allocation10], %s181
          %s183 = sand.u32 %s53, 1
          %s184 = smul.addr %s183, 16
          %s185 = scalar_lea.vmem [#allocation9], %s184
          %s186 = smul.u32 %s25, 2
          %s187 = sadd.s32 %s186, %s26
          %s188 = smul.u32 2, %s187
          %s190 = ssub.s32 256, 256
          %191 = vsyncadd %s182, %s190
          %s192 = smul.addr %s188, 2
          %s193 = sadd.s32 %s27, %s192
          %s194 = smul.addr %s193, 128
          %s195 = scalar_lea.hbm %s0, %s194
          %s196 = sshll.u32 %s185, 4
          %s197 = int_to_ptr.vmem [resolvable:$true] %s196
          %202 = dma.hbm_to_vmem [thread:$0]  %s195, 256, %s197, %s182, 256, 128, 8
        $region20: #{tpu_custom_call.1} parent=15 // pred_fallthru
          _
        // Predicated region
        $region21: #{tpu_custom_call.1} parent=15 // pred_check
          %p203 = pneg %p95
        $region22: #{tpu_custom_call.1} parent=15 // pred_check_branch
          %205 = sbr.rel (%p203) target = $region24
        $region23: #{tpu_custom_call.1} parent=15 // pred_region
          %s206 = sand.u32 %s18, 1
          %s207 = scalar_lea.sflag [#allocation13], %s206
          %s208 = sand.u32 %s85, 1
          %s209 = smul.addr %s208, 16
          %s210 = scalar_lea.vmem [#allocation12], %s209
          %s211 = smul.u32 %s25, 2
          %s212 = sadd.s32 %s211, %s26
          %s213 = smul.u32 2, %s212
          %s215 = ssub.s32 256, 256
          %216 = vsyncadd %s207, %s215
          %s217 = smul.addr %s213, 2
          %s218 = sadd.s32 %s27, %s217
          %s219 = smul.addr %s218, 128
          %s220 = scalar_lea.hbm %s1, %s219
          %s221 = sshll.u32 %s210, 4
          %s222 = int_to_ptr.vmem [resolvable:$true] %s221
          %227 = dma.hbm_to_vmem [thread:$0]  %s220, 256, %s222, %s207, 256, 128, 8
        $region24: #{tpu_custom_call.1} parent=15 // pred_fallthru
          _
        // Predicated region
        $region25: #{tpu_custom_call.1} parent=15 // pred_check
          %p228 = pneg %p127
        $region26: #{tpu_custom_call.1} parent=15 // pred_check_branch
          %230 = sbr.rel (%p228) target = $region28
        $region27: #{tpu_custom_call.1} parent=15 // pred_region
          %s231 = sand.u32 %s18, 1
          %s232 = scalar_lea.sflag [#allocation13], %s231
          %s233 = sand.u32 %s117, 1
          %s234 = smul.addr %s233, 16
          %s235 = scalar_lea.vmem [#allocation14], %s234
          %s236 = smul.u32 %s25, 2
          %s237 = sadd.s32 %s236, %s26
          %s238 = smul.u32 2, %s237
          %s240 = ssub.s32 256, 256
          %241 = vsyncadd %s232, %s240
          %s242 = smul.addr %s238, 2
          %s243 = sadd.s32 %s27, %s242
          %s244 = smul.addr %s243, 128
          %s245 = scalar_lea.hbm %s2, %s244
          %s246 = sshll.u32 %s235, 4
          %s247 = int_to_ptr.vmem [resolvable:$true] %s246
          %252 = dma.hbm_to_vmem [thread:$0]  %s245, 256, %s247, %s232, 256, 128, 8
        $region28: #{tpu_custom_call.1} parent=15 // pred_fallthru
          _
      $region16: #{tpu_custom_call.1} parent=5 // pred_fallthru
        _
      %p253 = scmp.le.s32.totalorder 1, %s18
      %p254 = scmp.lt.s32.totalorder %s18, 9
      %p255 = pnand %p253, %p254
      %p256 = pneg %p255
      // Predicated region
      $region29: #{tpu_custom_call.1} parent=5 // pred_check
        _
      $region30: #{tpu_custom_call.1} parent=5 // pred_check_branch
        %258 = sbr.rel (%p255) target = $region32
      $region31: #{tpu_custom_call.1} parent=5 // pred_region
        %s259 = ssub.s32 %s18, 1
        %s260 = sand.u32 %s56, 1
        %s261 = scalar_lea.sflag [#allocation10], %s260
        %s262 = sand.u32 %s56, 1
        %s263 = smul.addr %s262, 16
        %s264 = scalar_lea.vmem [#allocation9], %s263
        // Predicated region
        $region33: #{tpu_custom_call.1} parent=31 // pred_check
          %p265 = pneg %p69
        $region34: #{tpu_custom_call.1} parent=31 // pred_check_branch
          %267 = sbr.rel (%p265) target = $region36
        $region35: #{tpu_custom_call.1} parent=31 // pred_region
          %268 = dma.done %s261, 256
        $region36: #{tpu_custom_call.1} parent=31 // pred_fallthru
          _
        %s269 = sand.u32 %s23, 1
        %s270 = scalar_lea.sflag [#allocation13], %s269
        %s271 = sand.u32 %s88, 1
        %s272 = smul.addr %s271, 16
        %s273 = scalar_lea.vmem [#allocation12], %s272
        // Predicated region
        $region37: #{tpu_custom_call.1} parent=31 // pred_check
          %p274 = pneg %p101
        $region38: #{tpu_custom_call.1} parent=31 // pred_check_branch
          %276 = sbr.rel (%p274) target = $region40
        $region39: #{tpu_custom_call.1} parent=31 // pred_region
          %277 = dma.done %s270, 256
        $region40: #{tpu_custom_call.1} parent=31 // pred_fallthru
          _
        %s278 = sand.u32 %s23, 1
        %s279 = scalar_lea.sflag [#allocation13], %s278
        %s280 = sand.u32 %s120, 1
        %s281 = smul.addr %s280, 16
        %s282 = scalar_lea.vmem [#allocation14], %s281
        // Predicated region
        $region41: #{tpu_custom_call.1} parent=31 // pred_check
          %p283 = pneg %p133
        $region42: #{tpu_custom_call.1} parent=31 // pred_check_branch
          %285 = sbr.rel (%p283) target = $region44
        $region43: #{tpu_custom_call.1} parent=31 // pred_region
          %286 = dma.done %s279, 256
        $region44: #{tpu_custom_call.1} parent=31 // pred_fallthru
          _
        %s287 = sand.u32 %s56, 1
        %s288 = scalar_lea.sflag [#allocation10], %s287
        %s289 = sand.u32 %s56, 1
        %s290 = smul.addr %s289, 16
        %s291 = scalar_lea.vmem [#allocation9], %s290
        %p292 = pneg %p69
        %p293 = pneg %p66
        %s294 = sand.u32 %s23, 1
        %s295 = scalar_lea.sflag [#allocation13], %s294
        %s296 = sand.u32 %s88, 1
        %s297 = smul.addr %s296, 16
        %s298 = scalar_lea.vmem [#allocation12], %s297
        %p299 = pneg %p101
        %p300 = pneg %p98
        %s301 = sand.u32 %s23, 1
        %s302 = scalar_lea.sflag [#allocation13], %s301
        %s303 = sand.u32 %s120, 1
        %s304 = smul.addr %s303, 16
        %s305 = scalar_lea.vmem [#allocation14], %s304
        %p306 = pneg %p133
        %p307 = pneg %p130
        %p308 = pneg %p159
        %p309 = pneg %p156
        %s310 = sand.u32 %s146, 1
        %s311 = scalar_lea.sflag [#allocation11], %s310
        %s312 = sand.u32 %s146, 1
        %s313 = smul.addr %s312, 8
        %s314 = scalar_lea.vmem [#allocation15], %s313
        %s315 = smul.u32 %s28, 2
        %s316 = sadd.s32 %s315, %s29
        %s317 = smul.u32 2, %s316
        %s318 = smul.u32 %s28, 2
        %s319 = sadd.s32 %s318, %s29
        %s320 = smul.u32 2, %s319
        %s321 = smul.u32 %s28, 2
        %s322 = sadd.s32 %s321, %s29
        %s323 = smul.u32 2, %s322
        %p324 = scmp.eq.s32.totalorder %s29, 0
        %p325 = scmp.eq.s32.totalorder %s30, 0
        %p326 = pnand %p324, %p325
        %p327 = pneg %p326
        // Predicated region
        $region45: #{tpu_custom_call.1} parent=31 // pred_check
          _
        $region46: #{tpu_custom_call.1} parent=31 // pred_check_branch
          %329 = sbr.rel (%p326) target = $region48
        $region47: #{tpu_custom_call.1} parent=31 // pred_region
          %vm330 = vcmask 130048
          %331 = vst.msk [vmem:[#allocation2] sm:$0xff] %vm330, 0.0
          %332 = vst.msk [vmem:[#allocation3] sm:$0xff] %vm330, 0.0
          %333 = vst.msk [vmem:[#allocation4] sm:$0xff] %vm330, 0.0
          %334 = vst.msk [vmem:[#allocation5] sm:$0xff] %vm330, 0.0
          %335 = vst.msk [vmem:[#allocation6] sm:$0xff] %vm330, 0.0
          %vm336 = vcmask 122880
          %337 = vst.msk [vmem:[#allocation7] sm:$0x1] %vm336, 0.0
        $region48: #{tpu_custom_call.1} parent=31 // pred_fallthru
          _
        %v338 = vld [vmem:[%s264] sm:$0xff]
        %v339 = vld [vmem:[%s264 + $0x8] sm:$0xff]
        %v340 = vld [vmem:[%s273] sm:$0xff]
        %v341 = vld [vmem:[%s273 + $0x8] sm:$0xff]
        %v342 = vld [vmem:[%s282] sm:$0xff]
        %v343 = vld [vmem:[%s282 + $0x8] sm:$0xff]
        %v344 = vsub.f32 %v340, %v342
        %v345 = vsub.f32 %v341, %v343
        %v346 = vsub.f32 1.0, %v338
        %v347 = vsub.f32 1.0, %v339
        %v348 = vmul.f32 %v346, %v344
        %v349 = vmul.f32 %v347, %v345
        %v350 = vadd.f32 %v342, %v348
        %v351 = vadd.f32 %v343, %v349
        %v352 = vand.u32 2147483647, %v348
        %v353 = vand.u32 2147483647, %v349
        %v354 = vmul.f32 %v338, %v344
        %v355 = vmul.f32 %v339, %v345
        %v356 = vand.u32 2147483647, %v354
        %v357 = vand.u32 2147483647, %v355
        %v358 = vld [vmem:[#allocation4] sm:$0xff]
        %v359 = vand.u32 2147483647, %v344
        %v360 = vand.u32 2147483647, %v345
        %vm361 = vcmask 130048
        %v362 = vsel %vm361, %v359, 0.0
        %v363 = vsel %vm361, %v360, 0.0
        %v364 = vadd.f32 %v362, %v363
        %v365 = vadd.f32 %v358, %v364
        %366 = vst.msk [vmem:[#allocation4] sm:$0xff] %vm361, %v365
        %v367 = vld [vmem:[#allocation2] sm:$0xff]
        %v368 = vsel %vm361, %v352, 0.0
        %v369 = vsel %vm361, %v353, 0.0
        %v370 = vadd.f32 %v368, %v369
        %v371 = vadd.f32 %v367, %v370
        %372 = vst.msk [vmem:[#allocation2] sm:$0xff] %vm361, %v371
        %v373 = vld [vmem:[#allocation3] sm:$0xff]
        %v374 = vsel %vm361, %v356, 0.0
        %v375 = vsel %vm361, %v357, 0.0
        %v376 = vadd.f32 %v374, %v375
        %v377 = vadd.f32 %v373, %v376
        %378 = vst.msk [vmem:[#allocation3] sm:$0xff] %vm361, %v377
        %v379 = vlaneseq
        %v380 = vand.u32 %v379, 127
        %vm381 = vcmp.ge.s32.totalorder %v380, 1
        %v382 = vsel %vm381, 1, 0
        %v383 = vcvt.s32.f32 %v382
        %vm384 = vcmask 1047680
        %385 = vrot.lane.b32.xlu0 %v350, 16
        %v386 = vpop.permute.xlu0 %385
        %v387 = vsel %vm384, %v386, %v350
        %388 = vrot.lane.b32.xlu0 %v351, 16
        %v389 = vpop.permute.xlu0 %388
        %v390 = vsel %vm384, %v389, %v351
        %391 = vrot.lane.b32.xlu0 %v387, 16
        %v392 = vpop.permute.xlu0 %391
        %393 = vrot.lane.b32.xlu0 %v390, 16
        %v394 = vpop.permute.xlu0 %393
        %v395 = vsel %vm384, %v392, %v350
        %v396 = vsel %vm384, %v394, %v351
        %399 = vrot.lane.b32.xlu0 %v350, 15
        %v400 = vpop.permute.xlu0 %399
        %401 = vrot.lane.b32.xlu0 %v351, 15
        %v402 = vpop.permute.xlu0 %401
        %v405 = vsub.f32 %v395, %v400
        %v406 = vsub.f32 %v396, %v402
        %v407 = vld [vmem:[#allocation5] sm:$0xff]
        %v408 = vand.u32 2147483647, %v405
        %v409 = vand.u32 2147483647, %v406
        %411 = vrot.lane.b32.xlu0 %v383, 15
        %v412 = vpop.permute.xlu0 %411
        %v414 = vmul.f32 %v408, %v412
        %v415 = vmul.f32 %v409, %v412
        %vm416 = vcmask 253048
        %v417 = vsel %vm416, %v414, 0.0
        %v418 = vsel %vm416, %v415, 0.0
        %v419 = vadd.f32 %v417, %v418
        %421 = vrot.lane.b32.xlu0 %v419, 113
        %v422 = vpop.permute.xlu0 %421
        %v424 = vadd.f32 %v407, %v422
        %425 = vst.msk [vmem:[#allocation5] sm:$0xff] %vm361, %v424
        %v426 = vlaneseq
        %v427 = vshrl.u32 %v426, 7
        %vm428 = vcmp.ge.s32.totalorder %v427, 1
        %v429 = vsel %vm428, 1, 0
        %v430 = vcvt.s32.f32 %v429
        %v431 = vrot.slane %v350, 7
        %v432 = vrot.slane %v351, 7
        %v433 = vsub.f32 %v431, %v350
        %v434 = vsub.f32 %v432, %v351
        %v435 = vld [vmem:[#allocation6] sm:$0xff]
        %v436 = vand.u32 2147483647, %v433
        %v437 = vand.u32 2147483647, %v434
        %v438 = vmul.f32 %v436, %v430
        %v439 = vmul.f32 %v437, %v430
        %v440 = vsel %vm361, %v438, 0.0
        %v441 = vsel %vm361, %v439, 0.0
        %v442 = vadd.f32 %v440, %v441
        %v443 = vadd.f32 %v435, %v442
        %444 = vst.msk [vmem:[#allocation6] sm:$0xff] %vm361, %v443
        %p445 = scmp.gt.s32.totalorder %s30, 0
        // Predicated region
        $region49: #{tpu_custom_call.1} parent=31 // pred_check
          %p446 = pneg %p445
        $region50: #{tpu_custom_call.1} parent=31 // pred_check_branch
          %448 = sbr.rel (%p446) target = $region52
        $region51: #{tpu_custom_call.1} parent=31 // pred_region
          %v449 = vld [vmem:[#allocation8] sm:$0x3]
          %v451 = vrot.slane %v449, 1
          %v454 = vsub.f32 %v350, %v449
          %v455 = vsub.f32 %v351, %v451
          %v456 = vand.u32 2147483647, %v454
          %v457 = vand.u32 2147483647, %v455
          %v458 = vld [vmem:[#allocation7] sm:$0x1]
          %v461 = vrot.slane %v457, 7
          %vm462 = vcmask 1041409
          %v463 = vsel %vm462, %v461, %v456
          %vm465 = vcmask 123904
          %v466 = vsel %vm465, %v463, 0.0
          %v467 = vrot.slane %v466, 4
          %v468 = vadd.f32 %v466, %v467
          %v469 = vrot.slane %v468, 2
          %v470 = vadd.f32 %v468, %v469
          %v471 = vrot.slane %v470, 1
          %v472 = vadd.f32 %v470, %v471
          %v473 = vadd.f32 %v458, %v472
          %vm474 = vcmask 122880
          %475 = vst.msk [vmem:[#allocation7] sm:$0x1] %vm474, %v473
        $region52: #{tpu_custom_call.1} parent=31 // pred_fallthru
          _
        %v476 = vrot.slane %v351, 7
        %vm479 = vcmask 130055
        %480 = vst.msk [vmem:[#allocation8 - $0x7] sm:$0x80] %vm479, %v350
        %vm481 = vcmask 122880
        %482 = vst.msk [vmem:[#allocation8 + $0x1] sm:$0x1] %vm481, %v476
        %p483 = scmp.eq.s32.totalorder %s29, 1
        %p484 = scmp.eq.s32.totalorder %s30, 1
        %p485 = pnand %p483, %p484
        %p486 = pneg %p485
        // Predicated region
        $region53: #{tpu_custom_call.1} parent=31 // pred_check
          _
        $region54: #{tpu_custom_call.1} parent=31 // pred_check_branch
          %488 = sbr.rel (%p485) target = $region56
        $region55: #{tpu_custom_call.1} parent=31 // pred_region
          %v489 = vld [vmem:[#allocation6] sm:$0xff]
          %v490 = vsel %vm361, %v489, 0.0
          %491 = vadd.xlane.f32.xlu0 %v490
          %v492 = vpop.xlane.xlu0 %491
          %v493 = vrot.slane %v492, 4
          %v494 = vadd.f32 %v492, %v493
          %v495 = vrot.slane %v494, 2
          %v496 = vadd.f32 %v494, %v495
          %v497 = vrot.slane %v496, 1
          %v498 = vadd.f32 %v496, %v497
          %v499 = vld [vmem:[#allocation7] sm:$0x1]
          %v500 = vsel %vm481, %v499, 0.0
          %501 = vadd.xlane.f32.xlu0 %v500
          %v502 = vpop.xlane.xlu0 %501
          %v503 = vadd.f32 %v502, 0.0
          %v504 = vadd.f32 %v498, %v503
          %vm505 = vcmp.eq.s32.totalorder %v380, 0
          %v506 = vld [vmem:[#allocation2] sm:$0xff]
          %v507 = vsel %vm361, %v506, 0.0
          %508 = vadd.xlane.f32.xlu0 %v507
          %v509 = vpop.xlane.xlu0 %508
          %v510 = vrot.slane %v509, 4
          %v511 = vadd.f32 %v509, %v510
          %v512 = vrot.slane %v511, 2
          %v513 = vadd.f32 %v511, %v512
          %v514 = vrot.slane %v513, 1
          %v515 = vadd.f32 %v513, %v514
          %v516 = vsel %vm505, %v515, 0.0
          %vm517 = vcmp.eq.s32.totalorder %v380, 1
          %v518 = vld [vmem:[#allocation3] sm:$0xff]
          %v519 = vsel %vm361, %v518, 0.0
          %520 = vadd.xlane.f32.xlu0 %v519
          %v521 = vpop.xlane.xlu0 %520
          %v522 = vrot.slane %v521, 4
          %v523 = vadd.f32 %v521, %v522
          %v524 = vrot.slane %v523, 2
          %v525 = vadd.f32 %v523, %v524
          %v526 = vrot.slane %v525, 1
          %v527 = vadd.f32 %v525, %v526
          %v528 = vsel %vm517, %v527, 0.0
          %v529 = vadd.f32 %v516, %v528
          %vm530 = vcmp.eq.s32.totalorder %v380, 2
          %v531 = vld [vmem:[#allocation4] sm:$0xff]
          %v532 = vsel %vm361, %v531, 0.0
          %533 = vadd.xlane.f32.xlu0 %v532
          %v534 = vpop.xlane.xlu0 %533
          %v535 = vrot.slane %v534, 4
          %v536 = vadd.f32 %v534, %v535
          %v537 = vrot.slane %v536, 2
          %v538 = vadd.f32 %v536, %v537
          %v539 = vrot.slane %v538, 1
          %v540 = vadd.f32 %v538, %v539
          %v541 = vsel %vm530, %v540, 0.0
          %v542 = vadd.f32 %v529, %v541
          %vm543 = vcmp.eq.s32.totalorder %v380, 3
          %v544 = vld [vmem:[#allocation5] sm:$0xff]
          %v545 = vsel %vm361, %v544, 0.0
          %546 = vadd.xlane.f32.xlu0 %v545
          %v547 = vpop.xlane.xlu0 %546
          %v548 = vrot.slane %v547, 4
          %v549 = vadd.f32 %v547, %v548
          %v550 = vrot.slane %v549, 2
          %v551 = vadd.f32 %v549, %v550
          %v552 = vrot.slane %v551, 1
          %v553 = vadd.f32 %v551, %v552
          %v554 = vsel %vm543, %v553, 0.0
          %v555 = vadd.f32 %v542, %v554
          %vm556 = vcmp.eq.s32.totalorder %v380, 4
          %v557 = vlaneseq
          %v558 = vshrl.u32 %v557, 7
          %v559 = vsub.s32 0, %v558
          %v560 = vrot.slane %v504, %v559
          %v561 = vsel %vm556, %v560, 0.0
          %v562 = vadd.f32 %v555, %v561
          %563 = vst [vmem:[%s314] sm:$0xff] %v562
        $region56: #{tpu_custom_call.1} parent=31 // pred_fallthru
          _
        %s564 = sand.u32 %s146, 1
        %s565 = scalar_lea.sflag [#allocation11], %s564
        %s566 = sand.u32 %s146, 1
        %s567 = smul.addr %s566, 8
        %s568 = scalar_lea.vmem [#allocation15], %s567
        // Predicated region
        $region57: #{tpu_custom_call.1} parent=31 // pred_check
          %p569 = pneg %p156
        $region58: #{tpu_custom_call.1} parent=31 // pred_check_branch
          %571 = sbr.rel (%p569) target = $region60
        $region59: #{tpu_custom_call.1} parent=31 // pred_region
          %s573 = ssub.s32 128, 128
          %574 = vsyncadd %s565, %s573
          %s575 = smul.addr %s28, 128
          %s576 = scalar_lea.hbm %s3, %s575
          %s578 = sshll.u32 %s568, 4
          %s579 = int_to_ptr.vmem [resolvable:$true] %s578
          %581 = dma.vmem_to_hbm [thread:$0]  %s579, 128, %s576, %s565
        $region60: #{tpu_custom_call.1} parent=31 // pred_fallthru
          _
      $region32: #{tpu_custom_call.1} parent=5 // pred_fallthru
        _
      %p582 = scmp.le.s32.totalorder 2, %s18
      // Predicated region
      $region61: #{tpu_custom_call.1} parent=5 // pred_check
        %p583 = pneg %p582
      $region62: #{tpu_custom_call.1} parent=5 // pred_check_branch
        %585 = sbr.rel (%p583) target = $region64
      $region63: #{tpu_custom_call.1} parent=5 // pred_region
        %s586 = ssub.s32 %s18, 2
        // Predicated region
        $region65: #{tpu_custom_call.1} parent=63 // pred_check
          %p587 = pneg %p162
        $region66: #{tpu_custom_call.1} parent=63 // pred_check_branch
          %589 = sbr.rel (%p587) target = $region68
        $region67: #{tpu_custom_call.1} parent=63 // pred_region
          %s590 = sand.u32 %s147, 1
          %s591 = scalar_lea.sflag [#allocation11], %s590
          %s592 = sand.u32 %s147, 1
          %s593 = smul.addr %s592, 8
          %s594 = scalar_lea.vmem [#allocation15], %s593
          %595 = dma.done %s591, 128
        $region68: #{tpu_custom_call.1} parent=63 // pred_fallthru
          _
      $region64: #{tpu_custom_call.1} parent=5 // pred_fallthru
        _
    $region6: #{tpu_custom_call.1} parent=1 // loop_footer
      %s22 = sadd.s32 1, %s18
    $region7: #{tpu_custom_call.1} parent=1 // loop_footer_branch
      %17 = sbr.rel target = $region3
    $region8: #{tpu_custom_call.1} parent=1 // loop_exit
      _
    %596 = vsyncpa [#allocation10], 1
    %s597 = scalar_lea.sflag [#allocation10], 1
    %598 = vsyncpa %s597, 1
    %599 = vsyncpa [#allocation13], 1
    %s600 = scalar_lea.sflag [#allocation13], 1
    %601 = vsyncpa %s600, 1
    %602 = vsyncpa [#allocation11], 1
    %s603 = scalar_lea.sflag [#allocation11], 1
    %604 = vsyncpa %s603, 1

</llo_original>
